<compile_context>
chip_gen: v5e
topology: v5e:2x2
jax: 0.10.0
libtpu: 0.0.40
codegen_flags: <defaults>
</compile_context>

<pallas_src>
import jax
import jax.numpy as jnp
from jax import lax
from jax.experimental import pallas as pl
from jax.experimental.pallas import tpu as pltpu


def _rnn_classify_kernel(ids_ref,   # (T*B, 1) int32  time-major flattened tokens
                         emb_ref,   # (V, D)   embedding table
                         wih0_ref,  # (D, D)   layer-0 input->hidden
                         whh0_ref,  # (D, D)   layer-0 hidden->hidden
                         b0_ref,    # (1, D)   layer-0 bias (b_ih + b_hh)
                         w1_ref,    # (2D, D)  fused layer-1 weight [Wih1; Whh1]
                         b1_ref,    # (1, D)   layer-1 bias (b_ih + b_hh)
                         wcls_ref,  # (D, C)   classifier weight
                         bcls_ref,  # (1, C)   classifier bias
                         out_ref):  # (B, C)   logits
    TB = ids_ref.shape[0]
    V, D = emb_ref.shape
    B = out_ref.shape[0]
    T = TB // B

    # ---- fold the layer-0 input projection into the embedding table ------
    # (V,D)@(D,D) is 4x fewer MACs than projecting the (T*B,D) activations.
    emb_proj = jnp.dot(emb_ref[...], wih0_ref[...],
                       preferred_element_type=jnp.float32)          # (V, D)

    # ---- embedding lookup + input projection as ONE one-hot MXU matmul ---
    ids = ids_ref[...]                                              # (T*B, 1)
    onehot = (ids == lax.broadcasted_iota(jnp.int32, (TB, V), 1)
              ).astype(jnp.float32)                                 # (T*B, V)
    pre0 = (jnp.dot(onehot, emb_proj,
                    preferred_element_type=jnp.float32)
            + b0_ref[...])                                          # (T*B, D)

    # weights / bias read once, vreg-resident across the unrolled loop
    whh0 = whh0_ref[...]
    w1 = w1_ref[...]
    b1 = b1_ref[...]

    # h_0 = 0 for both layers (PyTorch default when no initial state given)
    h0 = jnp.zeros((B, D), jnp.float32)
    h1 = jnp.zeros((B, D), jnp.float32)

    # fully unrolled recurrence: exactly 2 MXU pushes per timestep
    for t in range(T):
        # layer 0: h0_t = tanh(pre0_t + h0_{t-1} @ Whh0)
        h0 = jnp.tanh(pre0[t * B:(t + 1) * B, :]
                      + jnp.dot(h0, whh0,
                                preferred_element_type=jnp.float32))
        # layer 1: h1_t = tanh([h0_t, h1_{t-1}] @ [Wih1; Whh1] + b1)
        h1 = jnp.tanh(jnp.dot(jnp.concatenate([h0, h1], axis=-1), w1,
                              preferred_element_type=jnp.float32) + b1)

    # all_layer[:, -1, :] == h1_T  ->  classify (single store, outside loop)
    out_ref[...] = (jnp.dot(h1, wcls_ref[...],
                            preferred_element_type=jnp.float32)
                    + bcls_ref[...])


@jax.jit
def rnn_classify_pallas(x_ids, emb, wih0, whh0, b0, w1, b1, wcls, bcls):
    # x_ids: (B, T) int32 token ids
    B, T = x_ids.shape
    C = wcls.shape[1]
    # tiny int32 transpose+flatten to time-major; layout plumbing only
    ids_tm = jnp.transpose(x_ids).reshape(T * B, 1).astype(jnp.int32)
    vmem = pl.BlockSpec(memory_space=pltpu.MemorySpace.VMEM)
    return pl.pallas_call(
        _rnn_classify_kernel,
        out_shape=jax.ShapeDtypeStruct((B, C), jnp.float32),
        in_specs=[vmem] * 9,
        out_specs=vmem,
    )(ids_tm, emb, wih0, whh0, b0, w1, b1, wcls, bcls)


def rnn_classify_ref(x_ids, emb, wih0, whh0, b0, w1, b1, wcls, bcls):
    """Pure-JAX reference with identical semantics (for correctness check)."""
    B, T = x_ids.shape
    D = emb.shape[1]
    x = emb[x_ids]                                  # (B, T, D) gather
    wih1, whh1 = w1[:D], w1[D:]
    h0 = jnp.zeros((B, D), jnp.float32)
    h1 = jnp.zeros((B, D), jnp.float32)
    for t in range(T):
        h0 = jnp.tanh(x[:, t, :] @ wih0 + b0 + h0 @ whh0)
        h1 = jnp.tanh(h0 @ wih1 + b1 + h1 @ whh1)
    return h1 @ wcls + bcls


class PallasTorchModel:
    """JAX/Pallas re-implementation of TorchModel's forward pass."""

    def __init__(self, vocab_size, str_length, char_dims, key):
        ks = jax.random.split(key, 10)
        s = 1.0 / jnp.sqrt(char_dims)
        self.embedding = jax.random.normal(
            ks[0], (vocab_size, char_dims), jnp.float32)
        # RNN layer 0 (weights stored pre-transposed so the kernel does x @ W)
        self.wih0 = jax.random.uniform(ks[1], (char_dims, char_dims),
                                       jnp.float32, -s, s)
        self.whh0 = jax.random.uniform(ks[2], (char_dims, char_dims),
                                       jnp.float32, -s, s)
        self.b0 = jax.random.uniform(ks[3], (1, char_dims),
                                     jnp.float32, -s, s)   # b_ih + b_hh folded
        # RNN layer 1 — stored fused as [Wih1; Whh1] of shape (2D, D)
        wih1 = jax.random.uniform(ks[4], (char_dims, char_dims),
                                  jnp.float32, -s, s)
        whh1 = jax.random.uniform(ks[5], (char_dims, char_dims),
                                  jnp.float32, -s, s)
        self.w1 = jnp.concatenate([wih1, whh1], axis=0)
        self.b1 = jax.random.uniform(ks[6], (1, char_dims),
                                     jnp.float32, -s, s)   # b_ih + b_hh folded
        # classifier
        C = str_length + 1
        self.wcls = jax.random.uniform(ks[7], (char_dims, C),
                                       jnp.float32, -s, s)
        self.bcls = jax.random.uniform(ks[8], (1, C), jnp.float32, -s, s)

    def params(self):
        return (self.embedding, self.wih0, self.whh0, self.b0,
                self.w1, self.b1, self.wcls, self.bcls)

    def __call__(self, x, y=None):
        # x: (B, T) int32 token ids — embedding lookup happens in-kernel
        y_pred = rnn_classify_pallas(x, *self.params())
        if y is None:
            return y_pred
        # cross_entropy with integer targets (mean reduction) — plain-JAX glue
        logz = jax.nn.log_softmax(y_pred, axis=-1)
        nll = -logz[jnp.arange(y_pred.shape[0]), y]
        return jnp.mean(nll)


if __name__ == "__main__":
    # small shapes consistent with the module
    vocab_size = 16
    str_length = 8          # sequence length T; classifier has T+1 classes
    char_dims = 32
    batch = 8

    key = jax.random.PRNGKey(0)
    k_model, k_x, k_y = jax.random.split(key, 3)

    model = PallasTorchModel(vocab_size, str_length, char_dims, k_model)

    x = jax.random.randint(k_x, (batch, str_length), 0, vocab_size,
                           dtype=jnp.int32)
    y = jax.random.randint(k_y, (batch,), 0, str_length + 1, dtype=jnp.int32)

    y_pred = model(x)                  # inference branch (y is None)
    y_pred = jax.block_until_ready(y_pred)
    assert y_pred.shape == (batch, str_length + 1)
    assert y_pred.dtype == jnp.float32
    assert bool(jnp.all(jnp.isfinite(y_pred)))

    # correctness check against a faithful pure-JAX reference
    y_ref = jax.block_until_ready(rnn_classify_ref(x, *model.params()))
    assert float(jnp.max(jnp.abs(y_pred - y_ref))) < 5e-2

    loss = model(x, y)                 # training branch (loss)
    loss = jax.block_until_ready(loss)
    assert loss.shape == ()
    assert bool(jnp.isfinite(loss))

    print("KERNEL_OK")
</pallas_src>

<mosaic_0001>
module attributes {stable_mosaic.version = 11 : i64} {
  func.func @_rnn_classify_kernel(%arg0: memref<64x1xi32, #tpu.memory_space<vmem>>, %arg1: memref<16x32xf32, #tpu.memory_space<vmem>>, %arg2: memref<32x32xf32, #tpu.memory_space<vmem>>, %arg3: memref<32x32xf32, #tpu.memory_space<vmem>>, %arg4: memref<1x32xf32, #tpu.memory_space<vmem>>, %arg5: memref<64x32xf32, #tpu.memory_space<vmem>>, %arg6: memref<1x32xf32, #tpu.memory_space<vmem>>, %arg7: memref<32x9xf32, #tpu.memory_space<vmem>>, %arg8: memref<1x9xf32, #tpu.memory_space<vmem>>, %arg9: memref<8x9xf32, #tpu.memory_space<vmem>>) attributes {dimension_semantics = [], scalar_prefetch = 0 : i64, scratch_operands = 0 : i64, tpu.core_type = #tpu.core_type<tc>} {
    %c0 = arith.constant 0 : index
    %c0_0 = arith.constant 0 : index
    %0 = vector.load %arg1[%c0, %c0_0] : memref<16x32xf32, #tpu.memory_space<vmem>>, vector<16x32xf32>
    %c0_1 = arith.constant 0 : index
    %c0_2 = arith.constant 0 : index
    %1 = vector.load %arg2[%c0_1, %c0_2] : memref<32x32xf32, #tpu.memory_space<vmem>>, vector<32x32xf32>
    %cst = arith.constant dense<0.000000e+00> : vector<16x32xf32>
    %2 = tpu.matmul %0, %1, %cst {dimension_numbers = #tpu.dot_dimension_numbers<[1], [0], [0], [1], [0, 0, 1, 1], [], []>} : vector<16x32xf32>, vector<32x32xf32>, vector<16x32xf32> -> vector<16x32xf32>
    %c0_3 = arith.constant 0 : index
    %c0_4 = arith.constant 0 : index
    %3 = vector.load %arg0[%c0_3, %c0_4] : memref<64x1xi32, #tpu.memory_space<vmem>>, vector<64x1xi32>
    %4 = tpu.iota {dimensions = array<i32: 1>} : vector<64x16xi32>
    %5 = vector.broadcast %3 : vector<64x1xi32> to vector<64x16xi32>
    %6 = arith.cmpi eq, %5, %4 : vector<64x16xi32>
    %7 = arith.extui %6 : vector<64x16xi1> to vector<64x16xi32>
    %8 = arith.sitofp %7 : vector<64x16xi32> to vector<64x16xf32>
    %cst_5 = arith.constant dense<0.000000e+00> : vector<64x32xf32>
    %9 = tpu.matmul %8, %2, %cst_5 {dimension_numbers = #tpu.dot_dimension_numbers<[1], [0], [0], [1], [0, 0, 1, 1], [], []>} : vector<64x16xf32>, vector<16x32xf32>, vector<64x32xf32> -> vector<64x32xf32>
    %c0_6 = arith.constant 0 : index
    %c0_7 = arith.constant 0 : index
    %10 = vector.load %arg4[%c0_6, %c0_7] : memref<1x32xf32, #tpu.memory_space<vmem>>, vector<1x32xf32>
    %11 = vector.broadcast %10 : vector<1x32xf32> to vector<64x32xf32>
    %12 = arith.addf %9, %11 : vector<64x32xf32>
    %c0_8 = arith.constant 0 : index
    %c0_9 = arith.constant 0 : index
    %13 = vector.load %arg3[%c0_8, %c0_9] : memref<32x32xf32, #tpu.memory_space<vmem>>, vector<32x32xf32>
    %c0_10 = arith.constant 0 : index
    %c0_11 = arith.constant 0 : index
    %14 = vector.load %arg5[%c0_10, %c0_11] : memref<64x32xf32, #tpu.memory_space<vmem>>, vector<64x32xf32>
    %c0_12 = arith.constant 0 : index
    %c0_13 = arith.constant 0 : index
    %15 = vector.load %arg6[%c0_12, %c0_13] : memref<1x32xf32, #tpu.memory_space<vmem>>, vector<1x32xf32>
    %cst_14 = arith.constant 0.000000e+00 : f32
    %16 = vector.broadcast %cst_14 : f32 to vector<8x32xf32>
    %cst_15 = arith.constant 0.000000e+00 : f32
    %17 = vector.broadcast %cst_15 : f32 to vector<8x32xf32>
    %18 = vector.extract_strided_slice %12 {offsets = [0, 0], sizes = [8, 32], strides = [1, 1]} : vector<64x32xf32> to vector<8x32xf32>
    %cst_16 = arith.constant dense<0.000000e+00> : vector<8x32xf32>
    %19 = tpu.matmul %16, %13, %cst_16 {dimension_numbers = #tpu.dot_dimension_numbers<[1], [0], [0], [1], [0, 0, 1, 1], [], []>} : vector<8x32xf32>, vector<32x32xf32>, vector<8x32xf32> -> vector<8x32xf32>
    %20 = arith.addf %18, %19 : vector<8x32xf32>
    %21 = math.tanh %20 : vector<8x32xf32>
    %22 = tpu.concatenate %21, %17 in 1 : vector<8x32xf32>, vector<8x32xf32> -> vector<8x64xf32>
    %cst_17 = arith.constant dense<0.000000e+00> : vector<8x32xf32>
    %23 = tpu.matmul %22, %14, %cst_17 {dimension_numbers = #tpu.dot_dimension_numbers<[1], [0], [0], [1], [0, 0, 1, 1], [], []>} : vector<8x64xf32>, vector<64x32xf32>, vector<8x32xf32> -> vector<8x32xf32>
    %24 = vector.broadcast %15 : vector<1x32xf32> to vector<8x32xf32>
    %25 = arith.addf %23, %24 : vector<8x32xf32>
    %26 = math.tanh %25 : vector<8x32xf32>
    %27 = vector.extract_strided_slice %12 {offsets = [8, 0], sizes = [8, 32], strides = [1, 1]} : vector<64x32xf32> to vector<8x32xf32>
    %cst_18 = arith.constant dense<0.000000e+00> : vector<8x32xf32>
    %28 = tpu.matmul %21, %13, %cst_18 {dimension_numbers = #tpu.dot_dimension_numbers<[1], [0], [0], [1], [0, 0, 1, 1], [], []>} : vector<8x32xf32>, vector<32x32xf32>, vector<8x32xf32> -> vector<8x32xf32>
    %29 = arith.addf %27, %28 : vector<8x32xf32>
    %30 = math.tanh %29 : vector<8x32xf32>
    %31 = tpu.concatenate %30, %26 in 1 : vector<8x32xf32>, vector<8x32xf32> -> vector<8x64xf32>
    %cst_19 = arith.constant dense<0.000000e+00> : vector<8x32xf32>
    %32 = tpu.matmul %31, %14, %cst_19 {dimension_numbers = #tpu.dot_dimension_numbers<[1], [0], [0], [1], [0, 0, 1, 1], [], []>} : vector<8x64xf32>, vector<64x32xf32>, vector<8x32xf32> -> vector<8x32xf32>
    %33 = vector.broadcast %15 : vector<1x32xf32> to vector<8x32xf32>
    %34 = arith.addf %32, %33 : vector<8x32xf32>
    %35 = math.tanh %34 : vector<8x32xf32>
    %36 = vector.extract_strided_slice %12 {offsets = [16, 0], sizes = [8, 32], strides = [1, 1]} : vector<64x32xf32> to vector<8x32xf32>
    %cst_20 = arith.constant dense<0.000000e+00> : vector<8x32xf32>
    %37 = tpu.matmul %30, %13, %cst_20 {dimension_numbers = #tpu.dot_dimension_numbers<[1], [0], [0], [1], [0, 0, 1, 1], [], []>} : vector<8x32xf32>, vector<32x32xf32>, vector<8x32xf32> -> vector<8x32xf32>
    %38 = arith.addf %36, %37 : vector<8x32xf32>
    %39 = math.tanh %38 : vector<8x32xf32>
    %40 = tpu.concatenate %39, %35 in 1 : vector<8x32xf32>, vector<8x32xf32> -> vector<8x64xf32>
    %cst_21 = arith.constant dense<0.000000e+00> : vector<8x32xf32>
    %41 = tpu.matmul %40, %14, %cst_21 {dimension_numbers = #tpu.dot_dimension_numbers<[1], [0], [0], [1], [0, 0, 1, 1], [], []>} : vector<8x64xf32>, vector<64x32xf32>, vector<8x32xf32> -> vector<8x32xf32>
    %42 = vector.broadcast %15 : vector<1x32xf32> to vector<8x32xf32>
    %43 = arith.addf %41, %42 : vector<8x32xf32>
    %44 = math.tanh %43 : vector<8x32xf32>
    %45 = vector.extract_strided_slice %12 {offsets = [24, 0], sizes = [8, 32], strides = [1, 1]} : vector<64x32xf32> to vector<8x32xf32>
    %cst_22 = arith.constant dense<0.000000e+00> : vector<8x32xf32>
    %46 = tpu.matmul %39, %13, %cst_22 {dimension_numbers = #tpu.dot_dimension_numbers<[1], [0], [0], [1], [0, 0, 1, 1], [], []>} : vector<8x32xf32>, vector<32x32xf32>, vector<8x32xf32> -> vector<8x32xf32>
    %47 = arith.addf %45, %46 : vector<8x32xf32>
    %48 = math.tanh %47 : vector<8x32xf32>
    %49 = tpu.concatenate %48, %44 in 1 : vector<8x32xf32>, vector<8x32xf32> -> vector<8x64xf32>
    %cst_23 = arith.constant dense<0.000000e+00> : vector<8x32xf32>
    %50 = tpu.matmul %49, %14, %cst_23 {dimension_numbers = #tpu.dot_dimension_numbers<[1], [0], [0], [1], [0, 0, 1, 1], [], []>} : vector<8x64xf32>, vector<64x32xf32>, vector<8x32xf32> -> vector<8x32xf32>
    %51 = vector.broadcast %15 : vector<1x32xf32> to vector<8x32xf32>
    %52 = arith.addf %50, %51 : vector<8x32xf32>
    %53 = math.tanh %52 : vector<8x32xf32>
    %54 = vector.extract_strided_slice %12 {offsets = [32, 0], sizes = [8, 32], strides = [1, 1]} : vector<64x32xf32> to vector<8x32xf32>
    %cst_24 = arith.constant dense<0.000000e+00> : vector<8x32xf32>
    %55 = tpu.matmul %48, %13, %cst_24 {dimension_numbers = #tpu.dot_dimension_numbers<[1], [0], [0], [1], [0, 0, 1, 1], [], []>} : vector<8x32xf32>, vector<32x32xf32>, vector<8x32xf32> -> vector<8x32xf32>
    %56 = arith.addf %54, %55 : vector<8x32xf32>
    %57 = math.tanh %56 : vector<8x32xf32>
    %58 = tpu.concatenate %57, %53 in 1 : vector<8x32xf32>, vector<8x32xf32> -> vector<8x64xf32>
    %cst_25 = arith.constant dense<0.000000e+00> : vector<8x32xf32>
    %59 = tpu.matmul %58, %14, %cst_25 {dimension_numbers = #tpu.dot_dimension_numbers<[1], [0], [0], [1], [0, 0, 1, 1], [], []>} : vector<8x64xf32>, vector<64x32xf32>, vector<8x32xf32> -> vector<8x32xf32>
    %60 = vector.broadcast %15 : vector<1x32xf32> to vector<8x32xf32>
    %61 = arith.addf %59, %60 : vector<8x32xf32>
    %62 = math.tanh %61 : vector<8x32xf32>
    %63 = vector.extract_strided_slice %12 {offsets = [40, 0], sizes = [8, 32], strides = [1, 1]} : vector<64x32xf32> to vector<8x32xf32>
    %cst_26 = arith.constant dense<0.000000e+00> : vector<8x32xf32>
    %64 = tpu.matmul %57, %13, %cst_26 {dimension_numbers = #tpu.dot_dimension_numbers<[1], [0], [0], [1], [0, 0, 1, 1], [], []>} : vector<8x32xf32>, vector<32x32xf32>, vector<8x32xf32> -> vector<8x32xf32>
    %65 = arith.addf %63, %64 : vector<8x32xf32>
    %66 = math.tanh %65 : vector<8x32xf32>
    %67 = tpu.concatenate %66, %62 in 1 : vector<8x32xf32>, vector<8x32xf32> -> vector<8x64xf32>
    %cst_27 = arith.constant dense<0.000000e+00> : vector<8x32xf32>
    %68 = tpu.matmul %67, %14, %cst_27 {dimension_numbers = #tpu.dot_dimension_numbers<[1], [0], [0], [1], [0, 0, 1, 1], [], []>} : vector<8x64xf32>, vector<64x32xf32>, vector<8x32xf32> -> vector<8x32xf32>
    %69 = vector.broadcast %15 : vector<1x32xf32> to vector<8x32xf32>
    %70 = arith.addf %68, %69 : vector<8x32xf32>
    %71 = math.tanh %70 : vector<8x32xf32>
    %72 = vector.extract_strided_slice %12 {offsets = [48, 0], sizes = [8, 32], strides = [1, 1]} : vector<64x32xf32> to vector<8x32xf32>
    %cst_28 = arith.constant dense<0.000000e+00> : vector<8x32xf32>
    %73 = tpu.matmul %66, %13, %cst_28 {dimension_numbers = #tpu.dot_dimension_numbers<[1], [0], [0], [1], [0, 0, 1, 1], [], []>} : vector<8x32xf32>, vector<32x32xf32>, vector<8x32xf32> -> vector<8x32xf32>
    %74 = arith.addf %72, %73 : vector<8x32xf32>
    %75 = math.tanh %74 : vector<8x32xf32>
    %76 = tpu.concatenate %75, %71 in 1 : vector<8x32xf32>, vector<8x32xf32> -> vector<8x64xf32>
    %cst_29 = arith.constant dense<0.000000e+00> : vector<8x32xf32>
    %77 = tpu.matmul %76, %14, %cst_29 {dimension_numbers = #tpu.dot_dimension_numbers<[1], [0], [0], [1], [0, 0, 1, 1], [], []>} : vector<8x64xf32>, vector<64x32xf32>, vector<8x32xf32> -> vector<8x32xf32>
    %78 = vector.broadcast %15 : vector<1x32xf32> to vector<8x32xf32>
    %79 = arith.addf %77, %78 : vector<8x32xf32>
    %80 = math.tanh %79 : vector<8x32xf32>
    %81 = vector.extract_strided_slice %12 {offsets = [56, 0], sizes = [8, 32], strides = [1, 1]} : vector<64x32xf32> to vector<8x32xf32>
    %cst_30 = arith.constant dense<0.000000e+00> : vector<8x32xf32>
    %82 = tpu.matmul %75, %13, %cst_30 {dimension_numbers = #tpu.dot_dimension_numbers<[1], [0], [0], [1], [0, 0, 1, 1], [], []>} : vector<8x32xf32>, vector<32x32xf32>, vector<8x32xf32> -> vector<8x32xf32>
    %83 = arith.addf %81, %82 : vector<8x32xf32>
    %84 = math.tanh %83 : vector<8x32xf32>
    %85 = tpu.concatenate %84, %80 in 1 : vector<8x32xf32>, vector<8x32xf32> -> vector<8x64xf32>
    %cst_31 = arith.constant dense<0.000000e+00> : vector<8x32xf32>
    %86 = tpu.matmul %85, %14, %cst_31 {dimension_numbers = #tpu.dot_dimension_numbers<[1], [0], [0], [1], [0, 0, 1, 1], [], []>} : vector<8x64xf32>, vector<64x32xf32>, vector<8x32xf32> -> vector<8x32xf32>
    %87 = vector.broadcast %15 : vector<1x32xf32> to vector<8x32xf32>
    %88 = arith.addf %86, %87 : vector<8x32xf32>
    %89 = math.tanh %88 : vector<8x32xf32>
    %c0_32 = arith.constant 0 : index
    %c0_33 = arith.constant 0 : index
    %90 = vector.load %arg7[%c0_32, %c0_33] : memref<32x9xf32, #tpu.memory_space<vmem>>, vector<32x9xf32>
    %cst_34 = arith.constant dense<0.000000e+00> : vector<8x9xf32>
    %91 = tpu.matmul %89, %90, %cst_34 {dimension_numbers = #tpu.dot_dimension_numbers<[1], [0], [0], [1], [0, 0, 1, 1], [], []>} : vector<8x32xf32>, vector<32x9xf32>, vector<8x9xf32> -> vector<8x9xf32>
    %c0_35 = arith.constant 0 : index
    %c0_36 = arith.constant 0 : index
    %92 = vector.load %arg8[%c0_35, %c0_36] : memref<1x9xf32, #tpu.memory_space<vmem>>, vector<1x9xf32>
    %93 = vector.broadcast %92 : vector<1x9xf32> to vector<8x9xf32>
    %94 = arith.addf %91, %93 : vector<8x9xf32>
    %c0_37 = arith.constant 0 : index
    %c0_38 = arith.constant 0 : index
    %95 = vector.load %arg9[%c0_37, %c0_38] : memref<8x9xf32, #tpu.memory_space<vmem>>, vector<8x9xf32>
    tpu.vector_store %arg9[%c0_37, %c0_38], %94 {strides = array<i32>} : memref<8x9xf32, #tpu.memory_space<vmem>>, vector<8x9xf32>,
    return
  }
}

</mosaic_0001>

<llo_original>
// kernel: rnn_classify_pallas.1
$region0: #{rnn_classify_pallas.1}
  #allocation0 [shape = 'u32[]', space=smem, size = 0x4, offset = 0x4, fixed_abs, tag = 'smem constant byte address 0x4 - core index']
  #allocation1 [shape = 'u32[72,128]{1,0:T(1,128)}', space=vmem, size = 0x9000, scoped, tag = 'internal scratch']
  %s0 = inlined_call_operand.vmem [shape: s32[64,1], index: 0, kind: input, shape index: {}]
  %s1 = inlined_call_operand.vmem [shape: f32[16,32], index: 1, kind: input, shape index: {}]
  %s2 = inlined_call_operand.vmem [shape: f32[32,32], index: 2, kind: input, shape index: {}]
  %s3 = inlined_call_operand.vmem [shape: f32[32,32], index: 3, kind: input, shape index: {}]
  %s4 = inlined_call_operand.vmem [shape: f32[1,32], index: 4, kind: input, shape index: {}]
  %s5 = inlined_call_operand.vmem [shape: f32[64,32], index: 5, kind: input, shape index: {}]
  %s6 = inlined_call_operand.vmem [shape: f32[1,32], index: 6, kind: input, shape index: {}]
  %s7 = inlined_call_operand.vmem [shape: f32[32,9], index: 7, kind: input, shape index: {}]
  %s8 = inlined_call_operand.vmem [shape: f32[1,9], index: 8, kind: input, shape index: {}]
  %s9 = inlined_call_operand.hbm [shape: f32[8,9], index: 9, kind: output, shape index: {}]
  %s10 = sld [smem:[#allocation0]]
  $region46: #{rnn_classify_pallas.1} parent=0
    _
  %s12 = ssub.s32 1, %s10
  %s13 = scalar_select 0, %s12, %s10
  $region1: #{rnn_classify_pallas.1} parent=0
    #allocation2 [shape = 'u8[4096]{0}', space=vmem, size = 0x1000, scoped, tag = 'output window, operand 0, single buffered']
    #allocation3 [shape = 's32[1]{0}', space=sflag, size = 0x4, scoped, tag = 'scoped memory for rnn_classify_pallas.1']
    %14 = vsyncpa [#allocation3], 0
    // Predicated region
    $region2: #{rnn_classify_pallas.1} parent=1 // pred_check
      _
    $region3: #{rnn_classify_pallas.1} parent=1 // pred_check_branch
      %16 = sbr.rel (0) target = $region5
    $region4: #{rnn_classify_pallas.1} parent=1 // pred_region
      _
    $region5: #{rnn_classify_pallas.1} parent=1 // pred_fallthru
      _
    // Predicated region
    $region6: #{rnn_classify_pallas.1} parent=1 // pred_check
      _
    $region7: #{rnn_classify_pallas.1} parent=1 // pred_check_branch
      %18 = sbr.rel (0) target = $region9
    $region8: #{rnn_classify_pallas.1} parent=1 // pred_region
      _
    $region9: #{rnn_classify_pallas.1} parent=1 // pred_fallthru
      _
    // Predicated region
    $region10: #{rnn_classify_pallas.1} parent=1 // pred_check
      _
    $region11: #{rnn_classify_pallas.1} parent=1 // pred_check_branch
      %20 = sbr.rel (0) target = $region13
    $region12: #{rnn_classify_pallas.1} parent=1 // pred_region
      _
    $region13: #{rnn_classify_pallas.1} parent=1 // pred_fallthru
      _
    // Predicated region
    $region14: #{rnn_classify_pallas.1} parent=1 // pred_check
      _
    $region15: #{rnn_classify_pallas.1} parent=1 // pred_check_branch
      %22 = sbr.rel (0) target = $region17
    $region16: #{rnn_classify_pallas.1} parent=1 // pred_region
      _
    $region17: #{rnn_classify_pallas.1} parent=1 // pred_fallthru
      _
    // Predicated region
    $region18: #{rnn_classify_pallas.1} parent=1 // pred_check
      _
    $region19: #{rnn_classify_pallas.1} parent=1 // pred_check_branch
      %24 = sbr.rel (0) target = $region21
    $region20: #{rnn_classify_pallas.1} parent=1 // pred_region
      _
    $region21: #{rnn_classify_pallas.1} parent=1 // pred_fallthru
      _
    // Predicated region
    $region22: #{rnn_classify_pallas.1} parent=1 // pred_check
      _
    $region23: #{rnn_classify_pallas.1} parent=1 // pred_check_branch
      %26 = sbr.rel (0) target = $region25
    $region24: #{rnn_classify_pallas.1} parent=1 // pred_region
      _
    $region25: #{rnn_classify_pallas.1} parent=1 // pred_fallthru
      _
    // Predicated region
    $region26: #{rnn_classify_pallas.1} parent=1 // pred_check
      _
    $region27: #{rnn_classify_pallas.1} parent=1 // pred_check_branch
      %28 = sbr.rel (0) target = $region29
    $region28: #{rnn_classify_pallas.1} parent=1 // pred_region
      _
    $region29: #{rnn_classify_pallas.1} parent=1 // pred_fallthru
      _
    // Predicated region
    $region30: #{rnn_classify_pallas.1} parent=1 // pred_check
      _
    $region31: #{rnn_classify_pallas.1} parent=1 // pred_check_branch
      %30 = sbr.rel (0) target = $region33
    $region32: #{rnn_classify_pallas.1} parent=1 // pred_region
      _
    $region33: #{rnn_classify_pallas.1} parent=1 // pred_fallthru
      _
    // Predicated region
    $region34: #{rnn_classify_pallas.1} parent=1 // pred_check
      _
    $region35: #{rnn_classify_pallas.1} parent=1 // pred_check_branch
      %32 = sbr.rel (0) target = $region37
    $region36: #{rnn_classify_pallas.1} parent=1 // pred_region
      _
    $region37: #{rnn_classify_pallas.1} parent=1 // pred_fallthru
      _
    %v33 = vld [vmem:[%s1] sm:$0xff]
    %v34 = vld [vmem:[%s1 + $0x8] sm:$0xff]
    %v35 = vld [vmem:[%s2] sm:$0xff]
    %v36 = vld [vmem:[%s2 + $0x8] sm:$0xff]
    %v37 = vld [vmem:[%s2 + $0x10] sm:$0xff]
    %v38 = vld [vmem:[%s2 + $0x18] sm:$0xff]
    %vm39 = vcmask 261120
    %v41 = vsel %vm39, %v33, 0
    %v44 = vsel %vm39, %v34, 0
    %46 = vmatpush.msra.mxu0 0.0
    %47 = vmatpush.msra.mxu0 0.0
    %48 = vmatpush.msra.mxu0 0.0
    %49 = vmatpush.msra.mxu0 0.0
    %50 = vmatpush.msra.mxu0 0.0
    %51 = vmatpush.msra.mxu0 0.0
    %52 = vmatpush.msra.mxu0 0.0
    %53 = vmatpush.msra.mxu0 0.0
    %54 = vmatpush.msra.mxu0 0.0
    %55 = vmatpush.msra.mxu0 0.0
    %56 = vmatpush.msra.mxu0 0.0
    %57 = vmatpush.msra.mxu0 0.0
    %58 = vmatpush.msra.mxu0 %v38
    %59 = vmatpush.msra.mxu0 %v37
    %60 = vmatpush.msra.mxu0 %v36
    %61 = vmatpush.msra.mxu0 %v35
    %62 = vmatmul.f32.gmra.mxu0 %v41
    %v63 = vpop.f32.mrf.mxu0
    %v64 = vadd.f32 0.0, %v63
    %65 = vmatmul.f32.gmra.mxu0 %v44
    %v66 = vpop.f32.mrf.mxu0
    %v67 = vadd.f32 0.0, %v66
    %68 = vdwg.mxu0
    %v69 = vld [vmem:[%s0] sm:$0xff]
    %v70 = vld [vmem:[%s0 + $0x8] sm:$0xff]
    %v71 = vld [vmem:[%s0 + $0x10] sm:$0xff]
    %v72 = vld [vmem:[%s0 + $0x18] sm:$0xff]
    %v73 = vld [vmem:[%s0 + $0x20] sm:$0xff]
    %v74 = vld [vmem:[%s0 + $0x28] sm:$0xff]
    %v75 = vld [vmem:[%s0 + $0x30] sm:$0xff]
    %v76 = vld [vmem:[%s0 + $0x38] sm:$0xff]
    %v77 = vlaneseq
    %v78 = vand.u32 %v77, 127
    %79 = vset.pattern.permute.xlu0 0
    %80 = vperm.xlu0 %79, %v69
    %v81 = vpop.permute.xlu0 %80
    %82 = vset.pattern.permute.xlu0 0
    %83 = vperm.xlu0 %82, %v70
    %v84 = vpop.permute.xlu0 %83
    %85 = vset.pattern.permute.xlu0 0
    %86 = vperm.xlu0 %85, %v71
    %v87 = vpop.permute.xlu0 %86
    %88 = vset.pattern.permute.xlu0 0
    %89 = vperm.xlu0 %88, %v72
    %v90 = vpop.permute.xlu0 %89
    %91 = vset.pattern.permute.xlu0 0
    %92 = vperm.xlu0 %91, %v73
    %v93 = vpop.permute.xlu0 %92
    %94 = vset.pattern.permute.xlu0 0
    %95 = vperm.xlu0 %94, %v74
    %v96 = vpop.permute.xlu0 %95
    %97 = vset.pattern.permute.xlu0 0
    %98 = vperm.xlu0 %97, %v75
    %v99 = vpop.permute.xlu0 %98
    %100 = vset.pattern.permute.xlu0 0
    %101 = vperm.xlu0 %100, %v76
    %v102 = vpop.permute.xlu0 %101
    %vm103 = vcmp.eq.s32.totalorder %v81, %v78
    %vm104 = vcmp.eq.s32.totalorder %v84, %v78
    %vm105 = vcmp.eq.s32.totalorder %v87, %v78
    %vm106 = vcmp.eq.s32.totalorder %v90, %v78
    %vm107 = vcmp.eq.s32.totalorder %v93, %v78
    %vm108 = vcmp.eq.s32.totalorder %v96, %v78
    %vm109 = vcmp.eq.s32.totalorder %v99, %v78
    %vm110 = vcmp.eq.s32.totalorder %v102, %v78
    %v111 = vsel %vm103, 1, 0
    %v112 = vsel %vm104, 1, 0
    %v113 = vsel %vm105, 1, 0
    %v114 = vsel %vm106, 1, 0
    %v115 = vsel %vm107, 1, 0
    %v116 = vsel %vm108, 1, 0
    %v117 = vsel %vm109, 1, 0
    %v118 = vsel %vm110, 1, 0
    %v119 = vcvt.s32.f32 %v111
    %v120 = vcvt.s32.f32 %v112
    %v121 = vcvt.s32.f32 %v113
    %v122 = vcvt.s32.f32 %v114
    %v123 = vcvt.s32.f32 %v115
    %v124 = vcvt.s32.f32 %v116
    %v125 = vcvt.s32.f32 %v117
    %v126 = vcvt.s32.f32 %v118
    %v127 = vld [vmem:[%s4] sm:$0x1]
    %v129 = vperm.slane %v127, 0
    %vm131 = vcmask 130048
    %v133 = vsel %vm131, %v119, 0
    %v136 = vsel %vm131, %v120, 0
    %v139 = vsel %vm131, %v121, 0
    %v142 = vsel %vm131, %v122, 0
    %v145 = vsel %vm131, %v123, 0
    %v148 = vsel %vm131, %v124, 0
    %v151 = vsel %vm131, %v125, 0
    %v154 = vsel %vm131, %v126, 0
    %156 = vmatpush.msra.mxu0 0.0
    %157 = vmatpush.msra.mxu0 0.0
    %158 = vmatpush.msra.mxu0 0.0
    %159 = vmatpush.msra.mxu0 0.0
    %160 = vmatpush.msra.mxu0 0.0
    %161 = vmatpush.msra.mxu0 0.0
    %162 = vmatpush.msra.mxu0 0.0
    %163 = vmatpush.msra.mxu0 0.0
    %164 = vmatpush.msra.mxu0 0.0
    %165 = vmatpush.msra.mxu0 0.0
    %166 = vmatpush.msra.mxu0 0.0
    %167 = vmatpush.msra.mxu0 0.0
    %168 = vmatpush.msra.mxu0 0.0
    %169 = vmatpush.msra.mxu0 0.0
    %170 = vmatpush.msra.mxu0 %v67
    %171 = vmatpush.msra.mxu0 %v64
    %172 = vmatmul.f32.gmra.mxu0 %v133
    %v173 = vpop.f32.mrf.mxu0
    %v174 = vadd.f32 %v129, %v173
    %175 = vmatmul.f32.gmra.mxu0 %v136
    %v176 = vpop.f32.mrf.mxu0
    %v177 = vadd.f32 %v129, %v176
    %178 = vmatmul.f32.gmra.mxu0 %v139
    %v179 = vpop.f32.mrf.mxu0
    %v180 = vadd.f32 %v129, %v179
    %181 = vmatmul.f32.gmra.mxu0 %v142
    %v182 = vpop.f32.mrf.mxu0
    %v183 = vadd.f32 %v129, %v182
    %184 = vmatmul.f32.gmra.mxu0 %v145
    %v185 = vpop.f32.mrf.mxu0
    %v186 = vadd.f32 %v129, %v185
    %187 = vmatmul.f32.gmra.mxu0 %v148
    %v188 = vpop.f32.mrf.mxu0
    %v189 = vadd.f32 %v129, %v188
    %190 = vmatmul.f32.gmra.mxu0 %v151
    %v191 = vpop.f32.mrf.mxu0
    %v192 = vadd.f32 %v129, %v191
    %193 = vmatmul.f32.gmra.mxu0 %v154
    %v194 = vpop.f32.mrf.mxu0
    %v195 = vadd.f32 %v129, %v194
    %196 = vdwg.mxu0
    %v197 = vld [vmem:[%s3] sm:$0xff]
    %v198 = vld [vmem:[%s3 + $0x8] sm:$0xff]
    %v199 = vld [vmem:[%s3 + $0x10] sm:$0xff]
    %v200 = vld [vmem:[%s3 + $0x18] sm:$0xff]
    %v201 = vld [vmem:[%s5] sm:$0xff]
    %v202 = vld [vmem:[%s5 + $0x8] sm:$0xff]
    %v203 = vld [vmem:[%s5 + $0x10] sm:$0xff]
    %v204 = vld [vmem:[%s5 + $0x18] sm:$0xff]
    %v205 = vld [vmem:[%s5 + $0x20] sm:$0xff]
    %v206 = vld [vmem:[%s5 + $0x28] sm:$0xff]
    %v207 = vld [vmem:[%s5 + $0x30] sm:$0xff]
    %v208 = vld [vmem:[%s5 + $0x38] sm:$0xff]
    %v209 = vld [vmem:[%s6] sm:$0x1]
    %v211 = vsel %vm39, 0.0, 0
    %213 = vmatpush.msra.mxu0 0.0
    %214 = vmatpush.msra.mxu0 0.0
    %215 = vmatpush.msra.mxu0 0.0
    %216 = vmatpush.msra.mxu0 0.0
    %217 = vmatpush.msra.mxu0 0.0
    %218 = vmatpush.msra.mxu0 0.0
    %219 = vmatpush.msra.mxu0 0.0
    %220 = vmatpush.msra.mxu0 0.0
    %221 = vmatpush.msra.mxu0 0.0
    %222 = vmatpush.msra.mxu0 0.0
    %223 = vmatpush.msra.mxu0 0.0
    %224 = vmatpush.msra.mxu0 0.0
    %225 = vmatpush.msra.mxu0 %v200
    %226 = vmatpush.msra.mxu0 %v199
    %227 = vmatpush.msra.mxu0 %v198
    %228 = vmatpush.msra.mxu0 %v197
    %229 = vmatmul.f32.gmra.mxu0 %v211
    %v230 = vpop.f32.mrf.mxu0
    %v231 = vadd.f32 0.0, %v230
    %232 = vdwg.mxu0
    %v233 = vadd.f32 %v174, %v231
    %v234 = vtanh.pop %v233
    %v235 = vsel %vm39, %v234, 0.0
    %v237 = vperm.slane %v209, 0
    %vm239 = vcmask 523264
    %v241 = vsel %vm239, %v235, 0
    %243 = vmatpush.msra.mxu0 0.0
    %244 = vmatpush.msra.mxu0 0.0
    %245 = vmatpush.msra.mxu0 0.0
    %246 = vmatpush.msra.mxu0 0.0
    %247 = vmatpush.msra.mxu0 0.0
    %248 = vmatpush.msra.mxu0 0.0
    %249 = vmatpush.msra.mxu0 0.0
    %250 = vmatpush.msra.mxu0 0.0
    %251 = vmatpush.msra.mxu0 %v208
    %252 = vmatpush.msra.mxu0 %v207
    %253 = vmatpush.msra.mxu0 %v206
    %254 = vmatpush.msra.mxu0 %v205
    %255 = vmatpush.msra.mxu0 %v204
    %256 = vmatpush.msra.mxu0 %v203
    %257 = vmatpush.msra.mxu0 %v202
    %258 = vmatpush.msra.mxu0 %v201
    %259 = vmatmul.f32.gmra.mxu0 %v241
    %v260 = vpop.f32.mrf.mxu0
    %v261 = vadd.f32 %v237, %v260
    %262 = vdwg.mxu0
    %v263 = vtanh.pop %v261
    %v265 = vsel %vm39, %v234, 0
    %267 = vmatpush.msra.mxu0 0.0
    %268 = vmatpush.msra.mxu0 0.0
    %269 = vmatpush.msra.mxu0 0.0
    %270 = vmatpush.msra.mxu0 0.0
    %271 = vmatpush.msra.mxu0 0.0
    %272 = vmatpush.msra.mxu0 0.0
    %273 = vmatpush.msra.mxu0 0.0
    %274 = vmatpush.msra.mxu0 0.0
    %275 = vmatpush.msra.mxu0 0.0
    %276 = vmatpush.msra.mxu0 0.0
    %277 = vmatpush.msra.mxu0 0.0
    %278 = vmatpush.msra.mxu0 0.0
    %279 = vmatpush.msra.mxu0 %v200
    %280 = vmatpush.msra.mxu0 %v199
    %281 = vmatpush.msra.mxu0 %v198
    %282 = vmatpush.msra.mxu0 %v197
    %283 = vmatmul.f32.gmra.mxu0 %v265
    %v284 = vpop.f32.mrf.mxu0
    %v285 = vadd.f32 0.0, %v284
    %286 = vdwg.mxu0
    %v287 = vadd.f32 %v177, %v285
    %v288 = vtanh.pop %v287
    %290 = vrot.lane.b32.xlu0 %v263, 32
    %v291 = vpop.permute.xlu0 %290
    %v293 = vsel %vm39, %v288, %v291
    %v295 = vsel %vm239, %v293, 0
    %297 = vmatpush.msra.mxu0 0.0
    %298 = vmatpush.msra.mxu0 0.0
    %299 = vmatpush.msra.mxu0 0.0
    %300 = vmatpush.msra.mxu0 0.0
    %301 = vmatpush.msra.mxu0 0.0
    %302 = vmatpush.msra.mxu0 0.0
    %303 = vmatpush.msra.mxu0 0.0
    %304 = vmatpush.msra.mxu0 0.0
    %305 = vmatpush.msra.mxu0 %v208
    %306 = vmatpush.msra.mxu0 %v207
    %307 = vmatpush.msra.mxu0 %v206
    %308 = vmatpush.msra.mxu0 %v205
    %309 = vmatpush.msra.mxu0 %v204
    %310 = vmatpush.msra.mxu0 %v203
    %311 = vmatpush.msra.mxu0 %v202
    %312 = vmatpush.msra.mxu0 %v201
    %313 = vmatmul.f32.gmra.mxu0 %v295
    %v314 = vpop.f32.mrf.mxu0
    %v315 = vadd.f32 %v237, %v314
    %316 = vdwg.mxu0
    %v317 = vtanh.pop %v315
    %v319 = vsel %vm39, %v288, 0
    %321 = vmatpush.msra.mxu0 0.0
    %322 = vmatpush.msra.mxu0 0.0
    %323 = vmatpush.msra.mxu0 0.0
    %324 = vmatpush.msra.mxu0 0.0
    %325 = vmatpush.msra.mxu0 0.0
    %326 = vmatpush.msra.mxu0 0.0
    %327 = vmatpush.msra.mxu0 0.0
    %328 = vmatpush.msra.mxu0 0.0
    %329 = vmatpush.msra.mxu0 0.0
    %330 = vmatpush.msra.mxu0 0.0
    %331 = vmatpush.msra.mxu0 0.0
    %332 = vmatpush.msra.mxu0 0.0
    %333 = vmatpush.msra.mxu0 %v200
    %334 = vmatpush.msra.mxu0 %v199
    %335 = vmatpush.msra.mxu0 %v198
    %336 = vmatpush.msra.mxu0 %v197
    %337 = vmatmul.f32.gmra.mxu0 %v319
    %v338 = vpop.f32.mrf.mxu0
    %v339 = vadd.f32 0.0, %v338
    %340 = vdwg.mxu0
    %v341 = vadd.f32 %v180, %v339
    %v342 = vtanh.pop %v341
    %344 = vrot.lane.b32.xlu0 %v317, 32
    %v345 = vpop.permute.xlu0 %344
    %v347 = vsel %vm39, %v342, %v345
    %v349 = vsel %vm239, %v347, 0
    %351 = vmatpush.msra.mxu0 0.0
    %352 = vmatpush.msra.mxu0 0.0
    %353 = vmatpush.msra.mxu0 0.0
    %354 = vmatpush.msra.mxu0 0.0
    %355 = vmatpush.msra.mxu0 0.0
    %356 = vmatpush.msra.mxu0 0.0
    %357 = vmatpush.msra.mxu0 0.0
    %358 = vmatpush.msra.mxu0 0.0
    %359 = vmatpush.msra.mxu0 %v208
    %360 = vmatpush.msra.mxu0 %v207
    %361 = vmatpush.msra.mxu0 %v206
    %362 = vmatpush.msra.mxu0 %v205
    %363 = vmatpush.msra.mxu0 %v204
    %364 = vmatpush.msra.mxu0 %v203
    %365 = vmatpush.msra.mxu0 %v202
    %366 = vmatpush.msra.mxu0 %v201
    %367 = vmatmul.f32.gmra.mxu0 %v349
    %v368 = vpop.f32.mrf.mxu0
    %v369 = vadd.f32 %v237, %v368
    %370 = vdwg.mxu0
    %v371 = vtanh.pop %v369
    %v373 = vsel %vm39, %v342, 0
    %375 = vmatpush.msra.mxu0 0.0
    %376 = vmatpush.msra.mxu0 0.0
    %377 = vmatpush.msra.mxu0 0.0
    %378 = vmatpush.msra.mxu0 0.0
    %379 = vmatpush.msra.mxu0 0.0
    %380 = vmatpush.msra.mxu0 0.0
    %381 = vmatpush.msra.mxu0 0.0
    %382 = vmatpush.msra.mxu0 0.0
    %383 = vmatpush.msra.mxu0 0.0
    %384 = vmatpush.msra.mxu0 0.0
    %385 = vmatpush.msra.mxu0 0.0
    %386 = vmatpush.msra.mxu0 0.0
    %387 = vmatpush.msra.mxu0 %v200
    %388 = vmatpush.msra.mxu0 %v199
    %389 = vmatpush.msra.mxu0 %v198
    %390 = vmatpush.msra.mxu0 %v197
    %391 = vmatmul.f32.gmra.mxu0 %v373
    %v392 = vpop.f32.mrf.mxu0
    %v393 = vadd.f32 0.0, %v392
    %394 = vdwg.mxu0
    %v395 = vadd.f32 %v183, %v393
    %v396 = vtanh.pop %v395
    %398 = vrot.lane.b32.xlu0 %v371, 32
    %v399 = vpop.permute.xlu0 %398
    %v401 = vsel %vm39, %v396, %v399
    %v403 = vsel %vm239, %v401, 0
    %405 = vmatpush.msra.mxu0 0.0
    %406 = vmatpush.msra.mxu0 0.0
    %407 = vmatpush.msra.mxu0 0.0
    %408 = vmatpush.msra.mxu0 0.0
    %409 = vmatpush.msra.mxu0 0.0
    %410 = vmatpush.msra.mxu0 0.0
    %411 = vmatpush.msra.mxu0 0.0
    %412 = vmatpush.msra.mxu0 0.0
    %413 = vmatpush.msra.mxu0 %v208
    %414 = vmatpush.msra.mxu0 %v207
    %415 = vmatpush.msra.mxu0 %v206
    %416 = vmatpush.msra.mxu0 %v205
    %417 = vmatpush.msra.mxu0 %v204
    %418 = vmatpush.msra.mxu0 %v203
    %419 = vmatpush.msra.mxu0 %v202
    %420 = vmatpush.msra.mxu0 %v201
    %421 = vmatmul.f32.gmra.mxu0 %v403
    %v422 = vpop.f32.mrf.mxu0
    %v423 = vadd.f32 %v237, %v422
    %424 = vdwg.mxu0
    %v425 = vtanh.pop %v423
    %v427 = vsel %vm39, %v396, 0
    %429 = vmatpush.msra.mxu0 0.0
    %430 = vmatpush.msra.mxu0 0.0
    %431 = vmatpush.msra.mxu0 0.0
    %432 = vmatpush.msra.mxu0 0.0
    %433 = vmatpush.msra.mxu0 0.0
    %434 = vmatpush.msra.mxu0 0.0
    %435 = vmatpush.msra.mxu0 0.0
    %436 = vmatpush.msra.mxu0 0.0
    %437 = vmatpush.msra.mxu0 0.0
    %438 = vmatpush.msra.mxu0 0.0
    %439 = vmatpush.msra.mxu0 0.0
    %440 = vmatpush.msra.mxu0 0.0
    %441 = vmatpush.msra.mxu0 %v200
    %442 = vmatpush.msra.mxu0 %v199
    %443 = vmatpush.msra.mxu0 %v198
    %444 = vmatpush.msra.mxu0 %v197
    %445 = vmatmul.f32.gmra.mxu0 %v427
    %v446 = vpop.f32.mrf.mxu0
    %v447 = vadd.f32 0.0, %v446
    %448 = vdwg.mxu0
    %v449 = vadd.f32 %v186, %v447
    %v450 = vtanh.pop %v449
    %452 = vrot.lane.b32.xlu0 %v425, 32
    %v453 = vpop.permute.xlu0 %452
    %v455 = vsel %vm39, %v450, %v453
    %v457 = vsel %vm239, %v455, 0
    %459 = vmatpush.msra.mxu0 0.0
    %460 = vmatpush.msra.mxu0 0.0
    %461 = vmatpush.msra.mxu0 0.0
    %462 = vmatpush.msra.mxu0 0.0
    %463 = vmatpush.msra.mxu0 0.0
    %464 = vmatpush.msra.mxu0 0.0
    %465 = vmatpush.msra.mxu0 0.0
    %466 = vmatpush.msra.mxu0 0.0
    %467 = vmatpush.msra.mxu0 %v208
    %468 = vmatpush.msra.mxu0 %v207
    %469 = vmatpush.msra.mxu0 %v206
    %470 = vmatpush.msra.mxu0 %v205
    %471 = vmatpush.msra.mxu0 %v204
    %472 = vmatpush.msra.mxu0 %v203
    %473 = vmatpush.msra.mxu0 %v202
    %474 = vmatpush.msra.mxu0 %v201
    %475 = vmatmul.f32.gmra.mxu0 %v457
    %v476 = vpop.f32.mrf.mxu0
    %v477 = vadd.f32 %v237, %v476
    %478 = vdwg.mxu0
    %v479 = vtanh.pop %v477
    %v481 = vsel %vm39, %v450, 0
    %483 = vmatpush.msra.mxu0 0.0
    %484 = vmatpush.msra.mxu0 0.0
    %485 = vmatpush.msra.mxu0 0.0
    %486 = vmatpush.msra.mxu0 0.0
    %487 = vmatpush.msra.mxu0 0.0
    %488 = vmatpush.msra.mxu0 0.0
    %489 = vmatpush.msra.mxu0 0.0
    %490 = vmatpush.msra.mxu0 0.0
    %491 = vmatpush.msra.mxu0 0.0
    %492 = vmatpush.msra.mxu0 0.0
    %493 = vmatpush.msra.mxu0 0.0
    %494 = vmatpush.msra.mxu0 0.0
    %495 = vmatpush.msra.mxu0 %v200
    %496 = vmatpush.msra.mxu0 %v199
    %497 = vmatpush.msra.mxu0 %v198
    %498 = vmatpush.msra.mxu0 %v197
    %499 = vmatmul.f32.gmra.mxu0 %v481
    %v500 = vpop.f32.mrf.mxu0
    %v501 = vadd.f32 0.0, %v500
    %502 = vdwg.mxu0
    %v503 = vadd.f32 %v189, %v501
    %v504 = vtanh.pop %v503
    %506 = vrot.lane.b32.xlu0 %v479, 32
    %v507 = vpop.permute.xlu0 %506
    %v509 = vsel %vm39, %v504, %v507
    %v511 = vsel %vm239, %v509, 0
    %513 = vmatpush.msra.mxu0 0.0
    %514 = vmatpush.msra.mxu0 0.0
    %515 = vmatpush.msra.mxu0 0.0
    %516 = vmatpush.msra.mxu0 0.0
    %517 = vmatpush.msra.mxu0 0.0
    %518 = vmatpush.msra.mxu0 0.0
    %519 = vmatpush.msra.mxu0 0.0
    %520 = vmatpush.msra.mxu0 0.0
    %521 = vmatpush.msra.mxu0 %v208
    %522 = vmatpush.msra.mxu0 %v207
    %523 = vmatpush.msra.mxu0 %v206
    %524 = vmatpush.msra.mxu0 %v205
    %525 = vmatpush.msra.mxu0 %v204
    %526 = vmatpush.msra.mxu0 %v203
    %527 = vmatpush.msra.mxu0 %v202
    %528 = vmatpush.msra.mxu0 %v201
    %529 = vmatmul.f32.gmra.mxu0 %v511
    %v530 = vpop.f32.mrf.mxu0
    %v531 = vadd.f32 %v237, %v530
    %532 = vdwg.mxu0
    %v533 = vtanh.pop %v531
    %v535 = vsel %vm39, %v504, 0
    %537 = vmatpush.msra.mxu0 0.0
    %538 = vmatpush.msra.mxu0 0.0
    %539 = vmatpush.msra.mxu0 0.0
    %540 = vmatpush.msra.mxu0 0.0
    %541 = vmatpush.msra.mxu0 0.0
    %542 = vmatpush.msra.mxu0 0.0
    %543 = vmatpush.msra.mxu0 0.0
    %544 = vmatpush.msra.mxu0 0.0
    %545 = vmatpush.msra.mxu0 0.0
    %546 = vmatpush.msra.mxu0 0.0
    %547 = vmatpush.msra.mxu0 0.0
    %548 = vmatpush.msra.mxu0 0.0
    %549 = vmatpush.msra.mxu0 %v200
    %550 = vmatpush.msra.mxu0 %v199
    %551 = vmatpush.msra.mxu0 %v198
    %552 = vmatpush.msra.mxu0 %v197
    %553 = vmatmul.f32.gmra.mxu0 %v535
    %v554 = vpop.f32.mrf.mxu0
    %v555 = vadd.f32 0.0, %v554
    %556 = vdwg.mxu0
    %v557 = vadd.f32 %v192, %v555
    %v558 = vtanh.pop %v557
    %560 = vrot.lane.b32.xlu0 %v533, 32
    %v561 = vpop.permute.xlu0 %560
    %v563 = vsel %vm39, %v558, %v561
    %v565 = vsel %vm239, %v563, 0
    %567 = vmatpush.msra.mxu0 0.0
    %568 = vmatpush.msra.mxu0 0.0
    %569 = vmatpush.msra.mxu0 0.0
    %570 = vmatpush.msra.mxu0 0.0
    %571 = vmatpush.msra.mxu0 0.0
    %572 = vmatpush.msra.mxu0 0.0
    %573 = vmatpush.msra.mxu0 0.0
    %574 = vmatpush.msra.mxu0 0.0
    %575 = vmatpush.msra.mxu0 %v208
    %576 = vmatpush.msra.mxu0 %v207
    %577 = vmatpush.msra.mxu0 %v206
    %578 = vmatpush.msra.mxu0 %v205
    %579 = vmatpush.msra.mxu0 %v204
    %580 = vmatpush.msra.mxu0 %v203
    %581 = vmatpush.msra.mxu0 %v202
    %582 = vmatpush.msra.mxu0 %v201
    %583 = vmatmul.f32.gmra.mxu0 %v565
    %v584 = vpop.f32.mrf.mxu0
    %v585 = vadd.f32 %v237, %v584
    %586 = vdwg.mxu0
    %v587 = vtanh.pop %v585
    %v589 = vsel %vm39, %v558, 0
    %591 = vmatpush.msra.mxu0 0.0
    %592 = vmatpush.msra.mxu0 0.0
    %593 = vmatpush.msra.mxu0 0.0
    %594 = vmatpush.msra.mxu0 0.0
    %595 = vmatpush.msra.mxu0 0.0
    %596 = vmatpush.msra.mxu0 0.0
    %597 = vmatpush.msra.mxu0 0.0
    %598 = vmatpush.msra.mxu0 0.0
    %599 = vmatpush.msra.mxu0 0.0
    %600 = vmatpush.msra.mxu0 0.0
    %601 = vmatpush.msra.mxu0 0.0
    %602 = vmatpush.msra.mxu0 0.0
    %603 = vmatpush.msra.mxu0 %v200
    %604 = vmatpush.msra.mxu0 %v199
    %605 = vmatpush.msra.mxu0 %v198
    %606 = vmatpush.msra.mxu0 %v197
    %607 = vmatmul.f32.gmra.mxu0 %v589
    %v608 = vpop.f32.mrf.mxu0
    %v609 = vadd.f32 0.0, %v608
    %610 = vdwg.mxu0
    %v611 = vadd.f32 %v195, %v609
    %v612 = vtanh.pop %v611
    %614 = vrot.lane.b32.xlu0 %v587, 32
    %v615 = vpop.permute.xlu0 %614
    %v617 = vsel %vm39, %v612, %v615
    %v619 = vsel %vm239, %v617, 0
    %621 = vmatpush.msra.mxu0 0.0
    %622 = vmatpush.msra.mxu0 0.0
    %623 = vmatpush.msra.mxu0 0.0
    %624 = vmatpush.msra.mxu0 0.0
    %625 = vmatpush.msra.mxu0 0.0
    %626 = vmatpush.msra.mxu0 0.0
    %627 = vmatpush.msra.mxu0 0.0
    %628 = vmatpush.msra.mxu0 0.0
    %629 = vmatpush.msra.mxu0 %v208
    %630 = vmatpush.msra.mxu0 %v207
    %631 = vmatpush.msra.mxu0 %v206
    %632 = vmatpush.msra.mxu0 %v205
    %633 = vmatpush.msra.mxu0 %v204
    %634 = vmatpush.msra.mxu0 %v203
    %635 = vmatpush.msra.mxu0 %v202
    %636 = vmatpush.msra.mxu0 %v201
    %637 = vmatmul.f32.gmra.mxu0 %v619
    %v638 = vpop.f32.mrf.mxu0
    %v639 = vadd.f32 %v237, %v638
    %640 = vdwg.mxu0
    %v641 = vtanh.pop %v639
    %v642 = vld [vmem:[%s7] sm:$0xff]
    %v643 = vld [vmem:[%s7 + $0x8] sm:$0xff]
    %v644 = vld [vmem:[%s7 + $0x10] sm:$0xff]
    %v645 = vld [vmem:[%s7 + $0x18] sm:$0xff]
    %v646 = vld [vmem:[%s8] sm:$0x1]
    %v648 = vperm.slane %v646, 0
    %v651 = vsel %vm39, %v641, 0
    %653 = vmatpush.msra.mxu0 0.0
    %654 = vmatpush.msra.mxu0 0.0
    %655 = vmatpush.msra.mxu0 0.0
    %656 = vmatpush.msra.mxu0 0.0
    %657 = vmatpush.msra.mxu0 0.0
    %658 = vmatpush.msra.mxu0 0.0
    %659 = vmatpush.msra.mxu0 0.0
    %660 = vmatpush.msra.mxu0 0.0
    %661 = vmatpush.msra.mxu0 0.0
    %662 = vmatpush.msra.mxu0 0.0
    %663 = vmatpush.msra.mxu0 0.0
    %664 = vmatpush.msra.mxu0 0.0
    %665 = vmatpush.msra.mxu0 %v645
    %666 = vmatpush.msra.mxu0 %v644
    %667 = vmatpush.msra.mxu0 %v643
    %668 = vmatpush.msra.mxu0 %v642
    %669 = vmatmul.f32.gmra.mxu0 %v651
    %v670 = vpop.f32.mrf.mxu0
    %v671 = vadd.f32 %v648, %v670
    %672 = vdwg.mxu0
    %vm673 = vcmask 72704
    %674 = vst.msk [vmem:[#allocation2] sm:$0xff] %vm673, %v671
    // Predicated region
    $region38: #{rnn_classify_pallas.1} parent=1 // pred_check
      _
    $region39: #{rnn_classify_pallas.1} parent=1 // pred_check_branch
      %676 = sbr.rel (0) target = $region41
    $region40: #{rnn_classify_pallas.1} parent=1 // pred_region
      %678 = vsyncadd [#allocation3], 0
      %s680 = sshll.u32 [#allocation2], 4
      %s681 = int_to_ptr.vmem [resolvable:$true] %s680
      %s682 = sshll.u32 %s9, 4
      %s683 = int_to_ptr.hbm [resolvable:$true] %s682
      %685 = dma.vmem_to_hbm [thread:$0]  %s681, 128, %s683, [#allocation3]
    $region41: #{rnn_classify_pallas.1} parent=1 // pred_fallthru
      _
    // Predicated region
    $region42: #{rnn_classify_pallas.1} parent=1 // pred_check
      _
    $region43: #{rnn_classify_pallas.1} parent=1 // pred_check_branch
      %687 = sbr.rel (0) target = $region45
    $region44: #{rnn_classify_pallas.1} parent=1 // pred_region
      %689 = dma.done [#allocation3], 128
    $region45: #{rnn_classify_pallas.1} parent=1 // pred_fallthru
      _
    %690 = vsyncpa [#allocation3], 1

</llo_original>
